<compile_context>
chip_gen: v6e
topology: v6e:2x2x1
jax: 0.10.0
libtpu: 0.0.40
codegen_flags: <defaults>
</compile_context>

<pallas_src>
import functools

import jax
import jax.numpy as jnp
from jax.experimental import pallas as pl
from jax.experimental.pallas import tpu as pltpu

LANE = 128     # vreg lane width
SUBLANE = 8    # f32 sublane count


def _round_up(x, m):
    return ((x + m - 1) // m) * m


# ---------------------------------------------------------------------------
# Kernel body: h = tanh(h @ W_l + b_l) for all but the last (pure linear)
# layer, entirely in VMEM/vregs for one batch tile.
# ---------------------------------------------------------------------------
def _fused_mlp_kernel(*refs, num_layers, compute_dtype):
    """refs = [x_ref, w0_ref, b0_ref, w1_ref, b1_ref, ..., o_ref]."""
    x_ref = refs[0]
    o_ref = refs[-1]
    # Single cast to the MXU compute dtype; weights are stored pre-cast so
    # there is no per-layer weight cast.
    h = x_ref[...].astype(compute_dtype)
    for l in range(num_layers):
        w_ref = refs[1 + 2 * l]
        b_ref = refs[2 + 2 * l]
        # MXU matmul with f32 accumulation.
        y = jnp.dot(h, w_ref[...], preferred_element_type=jnp.float32)
        y = y + b_ref[...]                   # (1, N) f32 bias broadcast
        if l < num_layers - 1:
            y = jnp.tanh(y)                  # f32 tanh (safe on v5e too)
            h = y.astype(compute_dtype)      # single cast after activation
        else:
            h = y
    o_ref[...] = h.astype(o_ref.dtype)


# ---------------------------------------------------------------------------
# One-time parameter preparation (padding + dtype cast), cached by the caller.
# ---------------------------------------------------------------------------
def prepare_mlp_critic_params(params, *, compute_dtype=jnp.bfloat16):
    """params: list of (w, b), w stored (in_dim, out_dim), b (out_dim,)."""
    num_layers = len(params)
    dims_in = [w.shape[0] for w, _ in params]
    dims_out = [w.shape[1] for w, _ in params]
    n_pad = [_round_up(d, LANE) for d in dims_out]        # lane-dense N dims
    k_dims = [dims_in[0]] + n_pad[:-1]                    # true K for layer 0

    layers = []
    for l, (w, b) in enumerate(params):
        di, do = w.shape
        w_p = jnp.zeros((k_dims[l], n_pad[l]), compute_dtype)
        w_p = w_p.at[:di, :do].set(w.astype(compute_dtype))
        b_p = jnp.zeros((1, n_pad[l]), jnp.float32)
        b_p = b_p.at[0, :do].set(b.astype(jnp.float32))
        layers.append((w_p, b_p))

    return {
        "layers": layers,
        "num_layers": num_layers,
        "input_dim": dims_in[0],
        "output_dim": dims_out[-1],
        "n_pad": n_pad,
        "k_dims": k_dims,
        "compute_dtype": compute_dtype,
    }


def _pallas_forward(prepared, x_p, tb, grid, single_buffer_weights):
    num_layers = prepared["num_layers"]
    n_pad = prepared["n_pad"]
    k_dims = prepared["k_dims"]
    compute_dtype = prepared["compute_dtype"]
    B_pad, d_in = x_p.shape
    out_itemsize = jnp.dtype(x_p.dtype).itemsize

    def _resident_spec(shape):
        # Constant block (same index every grid step): single-buffer it so the
        # weight only occupies VMEM once (critical on v7x's 64 MiB).
        if single_buffer_weights:
            return pl.BlockSpec(shape, lambda i: (0, 0),
                                pipeline_mode=pl.Buffered(1))
        return pl.BlockSpec(shape, lambda i: (0, 0))

    flat_inputs = [x_p]
    in_specs = [pl.BlockSpec((tb, d_in), lambda i: (i, 0))]
    for l, (w_p, b_p) in enumerate(prepared["layers"]):
        flat_inputs += [w_p, b_p]
        in_specs += [_resident_spec((k_dims[l], n_pad[l])),
                     _resident_spec((1, n_pad[l]))]

    out_spec = pl.BlockSpec((tb, n_pad[-1]), lambda i: (i, 0))
    out_shape = jax.ShapeDtypeStruct((B_pad, n_pad[-1]), x_p.dtype)

    # VMEM budget: resident weights (+2x if double-buffered fallback) + double
    # buffered input/output tiles + activation temporaries + slack.
    weight_bytes = sum(int(w.size) * w.dtype.itemsize
                       + int(b.size) * b.dtype.itemsize
                       for w, b in prepared["layers"])
    if not single_buffer_weights:
        weight_bytes *= 2
    io_bytes = (2 * tb * d_in * jnp.dtype(x_p.dtype).itemsize
                + 2 * tb * n_pad[-1] * out_itemsize)
    act_bytes = 2 * tb * max(n_pad) * 4
    budget = weight_bytes + io_bytes + act_bytes + (4 << 20)
    vmem_limit = int(min(max(budget, 32 << 20), 100 << 20))

    # Advisory cost estimate on the dims the MXU actually chews.
    flops = 2 * B_pad * sum(k * n for k, n in zip(k_dims, n_pad))
    transcendentals = B_pad * sum(n_pad[:-1])
    bytes_accessed = (int(x_p.size) * x_p.dtype.itemsize
                      + sum(int(w.size) * w.dtype.itemsize
                            + int(b.size) * b.dtype.itemsize
                            for w, b in prepared["layers"])
                      + B_pad * n_pad[-1] * out_itemsize)

    kernel = functools.partial(_fused_mlp_kernel,
                               num_layers=num_layers,
                               compute_dtype=compute_dtype)

    return pl.pallas_call(
        kernel,
        out_shape=out_shape,
        grid_spec=pltpu.PrefetchScalarGridSpec(
            num_scalar_prefetch=0,
            grid=grid,
            in_specs=in_specs,
            out_specs=out_spec,
        ),
        compiler_params=pltpu.CompilerParams(
            dimension_semantics=("parallel",),
            vmem_limit_bytes=vmem_limit),
        cost_estimate=pl.CostEstimate(
            flops=flops,
            transcendentals=transcendentals,
            bytes_accessed=bytes_accessed),
    )(*flat_inputs)


def mlp_critic_forward(prepared, x, *, batch_tile=256):
    """Fused MLPCritic forward. x: (B, input_dim) -> (B, output_dim)."""
    B, d_in = x.shape
    assert d_in == prepared["input_dim"]

    # Batch tiling: multiple of 8 sublanes; split into >= 2 grid steps when
    # the batch allows so the "parallel" axis can shard across v7x's two TCs.
    B8 = _round_up(B, SUBLANE)
    tb = min(_round_up(batch_tile, SUBLANE), B8)
    if B8 >= 2 * SUBLANE:
        tb = min(tb, _round_up((B8 + 1) // 2, SUBLANE))
    B_pad = _round_up(B8, tb)
    grid = (B_pad // tb,)

    # Only the batch dim is padded (zero rows, sliced off below); the feature
    # dim stays at its true size (full-dim block, no 8x K inflation).
    if B_pad == B:
        x_p = x
    else:
        x_p = jnp.zeros((B_pad, d_in), x.dtype).at[:B].set(x)

    try:
        out_padded = _pallas_forward(prepared, x_p, tb, grid,
                                     single_buffer_weights=True)
    except Exception:
        # pl.Buffered(1) / pipeline_mode not supported on this JAX version:
        # fall back to default (double-buffered) constant weight blocks.
        out_padded = _pallas_forward(prepared, x_p, tb, grid,
                                     single_buffer_weights=False)

    # Lane-dense store inside the kernel; cheap slice outside.
    return out_padded[:B, :prepared["output_dim"]]


def init_mlp_critic(key, num_layers, input_dim, hidden_dim, output_dim):
    """Mirror the PyTorch __init__: kaiming_normal_ (fan_in, gain=sqrt(2))
    weights, zero biases.  Weights stored transposed vs PyTorch: (in, out)."""
    if num_layers < 1:
        raise ValueError('number of layers should be positive!')
    if num_layers == 1:
        dims = [(input_dim, output_dim)]
    else:
        dims = [(input_dim, hidden_dim)]
        dims += [(hidden_dim, hidden_dim)] * (num_layers - 2)
        dims += [(hidden_dim, output_dim)]
    params = []
    for (d_in, d_out) in dims:
        key, sub = jax.random.split(key)
        std = (2.0 / d_in) ** 0.5          # kaiming_normal_, fan_in, a=0
        w = std * jax.random.normal(sub, (d_in, d_out), dtype=jnp.float32)
        b = jnp.zeros((d_out,), dtype=jnp.float32)
        params.append((w, b))
    return params


def _reference(params, x, cast_dtype=None):
    """Pure-JAX reference; optionally mimics the kernel's per-layer casts."""
    h = x
    for i, (w, b) in enumerate(params):
        if cast_dtype is not None:
            h = h.astype(cast_dtype)
            w = w.astype(cast_dtype)
        y = jnp.dot(h, w, preferred_element_type=jnp.float32) + b
        h = jnp.tanh(y) if i < len(params) - 1 else y
    return h


if __name__ == "__main__":
    num_layers = 3
    input_dim = 16
    hidden_dim = 32
    output_dim = 4
    batch = 8

    key = jax.random.PRNGKey(0)
    key, xkey = jax.random.split(key)
    x = jax.random.normal(xkey, (batch, input_dim), dtype=jnp.float32)

    params = init_mlp_critic(key, num_layers, input_dim, hidden_dim, output_dim)

    # 1) f32 compute path: padding/fusion must be exact vs the f32 reference.
    prep_f32 = prepare_mlp_critic_params(params, compute_dtype=jnp.float32)
    out_f32 = mlp_critic_forward(prep_f32, x)
    jax.block_until_ready(out_f32)
    ref_f32 = _reference(params, x)
    assert out_f32.shape == (batch, output_dim)
    assert jnp.allclose(out_f32, ref_f32, atol=1e-5, rtol=1e-5)

    # 2) Default bf16 MXU path (f32 accumulation), checked against a reference
    #    with the same dtype flow.
    prep_bf16 = prepare_mlp_critic_params(params)        # bf16 weights/compute
    out_bf16 = mlp_critic_forward(prep_bf16, x)
    jax.block_until_ready(out_bf16)
    ref_bf16 = _reference(params, x, cast_dtype=jnp.bfloat16)
    assert jnp.allclose(out_bf16, ref_bf16, atol=5e-2, rtol=5e-2)

    # 3) num_layers == 1 (pure linear) path.
    params1 = init_mlp_critic(key, 1, input_dim, hidden_dim, output_dim)
    prep1 = prepare_mlp_critic_params(params1, compute_dtype=jnp.float32)
    out1 = mlp_critic_forward(prep1, x)
    jax.block_until_ready(out1)
    ref1 = x @ params1[0][0] + params1[0][1]
    assert jnp.allclose(out1, ref1, atol=1e-5, rtol=1e-5)

    print("KERNEL_OK")
</pallas_src>

<mosaic_0001>
module attributes {stable_mosaic.version = 11 : i64} {
  func.func @_fused_mlp_kernel(%arg0: i32, %arg1: memref<8x16xf32, #tpu.memory_space<vmem>>, %arg2: memref<16x128xf32, #tpu.memory_space<vmem>>, %arg3: memref<1x128xf32, #tpu.memory_space<vmem>>, %arg4: memref<128x128xf32, #tpu.memory_space<vmem>>, %arg5: memref<1x128xf32, #tpu.memory_space<vmem>>, %arg6: memref<128x128xf32, #tpu.memory_space<vmem>>, %arg7: memref<1x128xf32, #tpu.memory_space<vmem>>, %arg8: memref<8x128xf32, #tpu.memory_space<vmem>>) attributes {dimension_semantics = [#tpu.dimension_semantics<parallel>], iteration_bounds = array<i64: 1>, scalar_prefetch = 0 : i64, scratch_operands = 0 : i64, tpu.core_type = #tpu.core_type<tc>, window_params = [{transform_indices = @transform_0, window_bounds = array<i64: 8, 16>}, {pipeline_mode = #tpu.pipeline_mode<synchronous>, transform_indices = @transform_1, window_bounds = array<i64: 16, 128>}, {pipeline_mode = #tpu.pipeline_mode<synchronous>, transform_indices = @transform_2, window_bounds = array<i64: 1, 128>}, {pipeline_mode = #tpu.pipeline_mode<synchronous>, transform_indices = @transform_3, window_bounds = array<i64: 128, 128>}, {pipeline_mode = #tpu.pipeline_mode<synchronous>, transform_indices = @transform_4, window_bounds = array<i64: 1, 128>}, {pipeline_mode = #tpu.pipeline_mode<synchronous>, transform_indices = @transform_5, window_bounds = array<i64: 128, 128>}, {pipeline_mode = #tpu.pipeline_mode<synchronous>, transform_indices = @transform_6, window_bounds = array<i64: 1, 128>}, {transform_indices = @transform_7, window_bounds = array<i64: 8, 128>}]} {
    %c0 = arith.constant 0 : index
    %c0_0 = arith.constant 0 : index
    %0 = vector.load %arg1[%c0, %c0_0] : memref<8x16xf32, #tpu.memory_space<vmem>>, vector<8x16xf32>
    %c0_1 = arith.constant 0 : index
    %c0_2 = arith.constant 0 : index
    %1 = vector.load %arg2[%c0_1, %c0_2] : memref<16x128xf32, #tpu.memory_space<vmem>>, vector<16x128xf32>
    %cst = arith.constant dense<0.000000e+00> : vector<8x128xf32>
    %2 = tpu.matmul %0, %1, %cst {dimension_numbers = #tpu.dot_dimension_numbers<[1], [0], [0], [1], [0, 0, 1, 1], [], []>} : vector<8x16xf32>, vector<16x128xf32>, vector<8x128xf32> -> vector<8x128xf32>
    %c0_3 = arith.constant 0 : index
    %c0_4 = arith.constant 0 : index
    %3 = vector.load %arg3[%c0_3, %c0_4] : memref<1x128xf32, #tpu.memory_space<vmem>>, vector<1x128xf32>
    %4 = vector.broadcast %3 : vector<1x128xf32> to vector<8x128xf32>
    %5 = arith.addf %2, %4 : vector<8x128xf32>
    %6 = math.tanh %5 : vector<8x128xf32>
    %c0_5 = arith.constant 0 : index
    %c0_6 = arith.constant 0 : index
    %7 = vector.load %arg4[%c0_5, %c0_6] : memref<128x128xf32, #tpu.memory_space<vmem>>, vector<128x128xf32>
    %cst_7 = arith.constant dense<0.000000e+00> : vector<8x128xf32>
    %8 = tpu.matmul %6, %7, %cst_7 {dimension_numbers = #tpu.dot_dimension_numbers<[1], [0], [0], [1], [0, 0, 1, 1], [], []>} : vector<8x128xf32>, vector<128x128xf32>, vector<8x128xf32> -> vector<8x128xf32>
    %c0_8 = arith.constant 0 : index
    %c0_9 = arith.constant 0 : index
    %9 = vector.load %arg5[%c0_8, %c0_9] : memref<1x128xf32, #tpu.memory_space<vmem>>, vector<1x128xf32>
    %10 = vector.broadcast %9 : vector<1x128xf32> to vector<8x128xf32>
    %11 = arith.addf %8, %10 : vector<8x128xf32>
    %12 = math.tanh %11 : vector<8x128xf32>
    %c0_10 = arith.constant 0 : index
    %c0_11 = arith.constant 0 : index
    %13 = vector.load %arg6[%c0_10, %c0_11] : memref<128x128xf32, #tpu.memory_space<vmem>>, vector<128x128xf32>
    %cst_12 = arith.constant dense<0.000000e+00> : vector<8x128xf32>
    %14 = tpu.matmul %12, %13, %cst_12 {dimension_numbers = #tpu.dot_dimension_numbers<[1], [0], [0], [1], [0, 0, 1, 1], [], []>} : vector<8x128xf32>, vector<128x128xf32>, vector<8x128xf32> -> vector<8x128xf32>
    %c0_13 = arith.constant 0 : index
    %c0_14 = arith.constant 0 : index
    %15 = vector.load %arg7[%c0_13, %c0_14] : memref<1x128xf32, #tpu.memory_space<vmem>>, vector<1x128xf32>
    %16 = vector.broadcast %15 : vector<1x128xf32> to vector<8x128xf32>
    %17 = arith.addf %14, %16 : vector<8x128xf32>
    %c0_15 = arith.constant 0 : index
    %c0_16 = arith.constant 0 : index
    %18 = vector.load %arg8[%c0_15, %c0_16] : memref<8x128xf32, #tpu.memory_space<vmem>>, vector<8x128xf32>
    tpu.vector_store %arg8[%c0_15, %c0_16], %17 {strides = array<i32>} : memref<8x128xf32, #tpu.memory_space<vmem>>, vector<8x128xf32>,
    return
  }
  func.func @transform_0(%arg0: i32) -> (i32, i32) {
    %c0_i32 = arith.constant 0 : i32
    %c0_i32_0 = arith.constant 0 : i32
    return %arg0, %c0_i32 : i32, i32
  }
  func.func @transform_1(%arg0: i32) -> (i32, i32) {
    %c0_i32 = arith.constant 0 : i32
    %c0_i32_0 = arith.constant 0 : i32
    %c0_i32_1 = arith.constant 0 : i32
    return %c0_i32, %c0_i32_0 : i32, i32
  }
  func.func @transform_2(%arg0: i32) -> (i32, i32) {
    %c0_i32 = arith.constant 0 : i32
    %c0_i32_0 = arith.constant 0 : i32
    %c0_i32_1 = arith.constant 0 : i32
    return %c0_i32, %c0_i32_0 : i32, i32
  }
  func.func @transform_3(%arg0: i32) -> (i32, i32) {
    %c0_i32 = arith.constant 0 : i32
    %c0_i32_0 = arith.constant 0 : i32
    %c0_i32_1 = arith.constant 0 : i32
    return %c0_i32, %c0_i32_0 : i32, i32
  }
  func.func @transform_4(%arg0: i32) -> (i32, i32) {
    %c0_i32 = arith.constant 0 : i32
    %c0_i32_0 = arith.constant 0 : i32
    %c0_i32_1 = arith.constant 0 : i32
    return %c0_i32, %c0_i32_0 : i32, i32
  }
  func.func @transform_5(%arg0: i32) -> (i32, i32) {
    %c0_i32 = arith.constant 0 : i32
    %c0_i32_0 = arith.constant 0 : i32
    %c0_i32_1 = arith.constant 0 : i32
    return %c0_i32, %c0_i32_0 : i32, i32
  }
  func.func @transform_6(%arg0: i32) -> (i32, i32) {
    %c0_i32 = arith.constant 0 : i32
    %c0_i32_0 = arith.constant 0 : i32
    %c0_i32_1 = arith.constant 0 : i32
    return %c0_i32, %c0_i32_0 : i32, i32
  }
  func.func @transform_7(%arg0: i32) -> (i32, i32) {
    %c0_i32 = arith.constant 0 : i32
    %c0_i32_0 = arith.constant 0 : i32
    return %arg0, %c0_i32 : i32, i32
  }
}

module attributes {stable_mosaic.version = 11 : i64} {
  func.func @_fused_mlp_kernel(%arg0: i32, %arg1: memref<8x16xf32, #tpu.memory_space<vmem>>, %arg2: memref<16x128xf32, #tpu.memory_space<vmem>>, %arg3: memref<1x128xf32, #tpu.memory_space<vmem>>, %arg4: memref<128x128xf32, #tpu.memory_space<vmem>>, %arg5: memref<1x128xf32, #tpu.memory_space<vmem>>, %arg6: memref<128x128xf32, #tpu.memory_space<vmem>>, %arg7: memref<1x128xf32, #tpu.memory_space<vmem>>, %arg8: memref<8x128xf32, #tpu.memory_space<vmem>>) attributes {dimension_semantics = [#tpu.dimension_semantics<parallel>], iteration_bounds = array<i64: 1>, scalar_prefetch = 0 : i64, scratch_operands = 0 : i64, tpu.core_type = #tpu.core_type<tc>, window_params = [{transform_indices = @transform_0, window_bounds = array<i64: 8, 16>}, {pipeline_mode = #tpu.pipeline_mode<synchronous>, transform_indices = @transform_1, window_bounds = array<i64: 16, 128>}, {pipeline_mode = #tpu.pipeline_mode<synchronous>, transform_indices = @transform_2, window_bounds = array<i64: 1, 128>}, {pipeline_mode = #tpu.pipeline_mode<synchronous>, transform_indices = @transform_3, window_bounds = array<i64: 128, 128>}, {pipeline_mode = #tpu.pipeline_mode<synchronous>, transform_indices = @transform_4, window_bounds = array<i64: 1, 128>}, {pipeline_mode = #tpu.pipeline_mode<synchronous>, transform_indices = @transform_5, window_bounds = array<i64: 128, 128>}, {pipeline_mode = #tpu.pipeline_mode<synchronous>, transform_indices = @transform_6, window_bounds = array<i64: 1, 128>}, {transform_indices = @transform_7, window_bounds = array<i64: 8, 128>}]} {
    %c0 = arith.constant 0 : index
    %c0_0 = arith.constant 0 : index
    %0 = vector.load %arg1[%c0, %c0_0] : memref<8x16xf32, #tpu.memory_space<vmem>>, vector<8x16xf32>
    %c0_1 = arith.constant 0 : index
    %c0_2 = arith.constant 0 : index
    %1 = vector.load %arg2[%c0_1, %c0_2] : memref<16x128xf32, #tpu.memory_space<vmem>>, vector<16x128xf32>
    %cst = arith.constant dense<0.000000e+00> : vector<8x128xf32>
    %2 = tpu.matmul %0, %1, %cst {dimension_numbers = #tpu.dot_dimension_numbers<[1], [0], [0], [1], [0, 0, 1, 1], [], []>} : vector<8x16xf32>, vector<16x128xf32>, vector<8x128xf32> -> vector<8x128xf32>
    %c0_3 = arith.constant 0 : index
    %c0_4 = arith.constant 0 : index
    %3 = vector.load %arg3[%c0_3, %c0_4] : memref<1x128xf32, #tpu.memory_space<vmem>>, vector<1x128xf32>
    %4 = vector.broadcast %3 : vector<1x128xf32> to vector<8x128xf32>
    %5 = arith.addf %2, %4 : vector<8x128xf32>
    %6 = math.tanh %5 : vector<8x128xf32>
    %c0_5 = arith.constant 0 : index
    %c0_6 = arith.constant 0 : index
    %7 = vector.load %arg4[%c0_5, %c0_6] : memref<128x128xf32, #tpu.memory_space<vmem>>, vector<128x128xf32>
    %cst_7 = arith.constant dense<0.000000e+00> : vector<8x128xf32>
    %8 = tpu.matmul %6, %7, %cst_7 {dimension_numbers = #tpu.dot_dimension_numbers<[1], [0], [0], [1], [0, 0, 1, 1], [], []>} : vector<8x128xf32>, vector<128x128xf32>, vector<8x128xf32> -> vector<8x128xf32>
    %c0_8 = arith.constant 0 : index
    %c0_9 = arith.constant 0 : index
    %9 = vector.load %arg5[%c0_8, %c0_9] : memref<1x128xf32, #tpu.memory_space<vmem>>, vector<1x128xf32>
    %10 = vector.broadcast %9 : vector<1x128xf32> to vector<8x128xf32>
    %11 = arith.addf %8, %10 : vector<8x128xf32>
    %12 = math.tanh %11 : vector<8x128xf32>
    %c0_10 = arith.constant 0 : index
    %c0_11 = arith.constant 0 : index
    %13 = vector.load %arg6[%c0_10, %c0_11] : memref<128x128xf32, #tpu.memory_space<vmem>>, vector<128x128xf32>
    %cst_12 = arith.constant dense<0.000000e+00> : vector<8x128xf32>
    %14 = tpu.matmul %12, %13, %cst_12 {dimension_numbers = #tpu.dot_dimension_numbers<[1], [0], [0], [1], [0, 0, 1, 1], [], []>} : vector<8x128xf32>, vector<128x128xf32>, vector<8x128xf32> -> vector<8x128xf32>
    %c0_13 = arith.constant 0 : index
    %c0_14 = arith.constant 0 : index
    %15 = vector.load %arg7[%c0_13, %c0_14] : memref<1x128xf32, #tpu.memory_space<vmem>>, vector<1x128xf32>
    %16 = vector.broadcast %15 : vector<1x128xf32> to vector<8x128xf32>
    %17 = arith.addf %14, %16 : vector<8x128xf32>
    %c0_15 = arith.constant 0 : index
    %c0_16 = arith.constant 0 : index
    %18 = vector.load %arg8[%c0_15, %c0_16] : memref<8x128xf32, #tpu.memory_space<vmem>>, vector<8x128xf32>
    tpu.vector_store %arg8[%c0_15, %c0_16], %17 {strides = array<i32>} : memref<8x128xf32, #tpu.memory_space<vmem>>, vector<8x128xf32>,
    return
  }
  func.func @transform_0(%arg0: i32) -> (i32, i32) {
    %c0_i32 = arith.constant 0 : i32
    %c0_i32_0 = arith.constant 0 : i32
    return %arg0, %c0_i32 : i32, i32
  }
  func.func @transform_1(%arg0: i32) -> (i32, i32) {
    %c0_i32 = arith.constant 0 : i32
    %c0_i32_0 = arith.constant 0 : i32
    %c0_i32_1 = arith.constant 0 : i32
    return %c0_i32, %c0_i32_0 : i32, i32
  }
  func.func @transform_2(%arg0: i32) -> (i32, i32) {
    %c0_i32 = arith.constant 0 : i32
    %c0_i32_0 = arith.constant 0 : i32
    %c0_i32_1 = arith.constant 0 : i32
    return %c0_i32, %c0_i32_0 : i32, i32
  }
  func.func @transform_3(%arg0: i32) -> (i32, i32) {
    %c0_i32 = arith.constant 0 : i32
    %c0_i32_0 = arith.constant 0 : i32
    %c0_i32_1 = arith.constant 0 : i32
    return %c0_i32, %c0_i32_0 : i32, i32
  }
  func.func @transform_4(%arg0: i32) -> (i32, i32) {
    %c0_i32 = arith.constant 0 : i32
    %c0_i32_0 = arith.constant 0 : i32
    %c0_i32_1 = arith.constant 0 : i32
    return %c0_i32, %c0_i32_0 : i32, i32
  }
  func.func @transform_5(%arg0: i32) -> (i32, i32) {
    %c0_i32 = arith.constant 0 : i32
    %c0_i32_0 = arith.constant 0 : i32
    %c0_i32_1 = arith.constant 0 : i32
    return %c0_i32, %c0_i32_0 : i32, i32
  }
  func.func @transform_6(%arg0: i32) -> (i32, i32) {
    %c0_i32 = arith.constant 0 : i32
    %c0_i32_0 = arith.constant 0 : i32
    %c0_i32_1 = arith.constant 0 : i32
    return %c0_i32, %c0_i32_0 : i32, i32
  }
  func.func @transform_7(%arg0: i32) -> (i32, i32) {
    %c0_i32 = arith.constant 0 : i32
    %c0_i32_0 = arith.constant 0 : i32
    return %arg0, %c0_i32 : i32, i32
  }
}

</mosaic_0001>

<llo_original>
// kernel: tpu_custom_call.1
$region0: #{tpu_custom_call.1}
  #allocation0 [shape = 'u32[]', space=smem, size = 0x4, offset = 0x4, fixed_abs, tag = 'smem constant byte address 0x4 - core index']
  #allocation1 [shape = 'u32[144,128]{1,0:T(1,128)}', space=vmem, size = 0x12000, scoped, tag = 'internal scratch']
  %s0 = inlined_call_operand.hbm [shape: f32[8,16], index: 0, kind: input, shape index: {}]
  %s1 = inlined_call_operand.hbm [shape: f32[16,128], index: 1, kind: input, shape index: {}]
  %s2 = inlined_call_operand.vmem [shape: f32[1,128], index: 2, kind: input, shape index: {}]
  %s3 = inlined_call_operand.hbm [shape: f32[128,128], index: 3, kind: input, shape index: {}]
  %s4 = inlined_call_operand.vmem [shape: f32[1,128], index: 4, kind: input, shape index: {}]
  %s5 = inlined_call_operand.hbm [shape: f32[128,128], index: 5, kind: input, shape index: {}]
  %s6 = inlined_call_operand.vmem [shape: f32[1,128], index: 6, kind: input, shape index: {}]
  %s7 = inlined_call_operand.hbm [shape: f32[8,128], index: 7, kind: output, shape index: {}]
  %s8 = sld [smem:[#allocation0]]
  $region54: #{tpu_custom_call.1} parent=0
    _
  %s10 = ssub.s32 1, %s8
  %s11 = scalar_select 0, %s10, %s8
  $region1: #{tpu_custom_call.1} parent=0
    #allocation2 [shape = 'u8[4096]{0}', space=vmem, size = 0x1000, scoped, tag = 'input window, operand 0, single buffered']
    #allocation3 [shape = 's32[1]{0}', space=sflag, size = 0x4, scoped, tag = 'scoped memory for tpu_custom_call.1']
    #allocation4 [shape = 's32[1]{0}', space=sflag, size = 0x4, scoped, tag = 'scoped memory for tpu_custom_call.1']
    #allocation5 [shape = 'u8[8192]{0}', space=vmem, size = 0x2000, scoped, tag = 'input window, operand 1, single buffered']
    #allocation6 [shape = 's32[1]{0}', space=sflag, size = 0x4, scoped, tag = 'scoped memory for tpu_custom_call.1']
    #allocation7 [shape = 'u8[65536]{0}', space=vmem, size = 0x10000, scoped, tag = 'input window, operand 3, single buffered']
    #allocation8 [shape = 'u8[65536]{0}', space=vmem, size = 0x10000, scoped, tag = 'input window, operand 5, single buffered']
    #allocation9 [shape = 's32[1]{0}', space=sflag, size = 0x4, scoped, tag = 'scoped memory for tpu_custom_call.1']
    #allocation10 [shape = 'u8[4096]{0}', space=vmem, size = 0x1000, scoped, tag = 'output window, operand 0, single buffered']
    %12 = vsyncpa [#allocation3], 0
    %13 = vsyncpa [#allocation6], 0
    %14 = vsyncpa [#allocation9], 0
    %15 = vsyncpa [#allocation4], 0
    // Predicated region
    $region2: #{tpu_custom_call.1} parent=1 // pred_check
      _
    $region3: #{tpu_custom_call.1} parent=1 // pred_check_branch
      %17 = sbr.rel (0) target = $region5
    $region4: #{tpu_custom_call.1} parent=1 // pred_region
      %s19 = ssub.s32 128, 128
      %20 = vsyncadd [#allocation3], %s19
      %s22 = sshll.u32 [#allocation2], 4
      %s23 = int_to_ptr.vmem [resolvable:$true] %s22
      %25 = dma.hbm_to_vmem [thread:$0]  %s0, 128, %s23, [#allocation3]
    $region5: #{tpu_custom_call.1} parent=1 // pred_fallthru
      _
    // Predicated region
    $region6: #{tpu_custom_call.1} parent=1 // pred_check
      _
    $region7: #{tpu_custom_call.1} parent=1 // pred_check_branch
      %27 = sbr.rel (0) target = $region9
    $region8: #{tpu_custom_call.1} parent=1 // pred_region
      %s29 = ssub.s32 256, 256
      %30 = vsyncadd [#allocation6], %s29
      %s31 = sshll.u32 [#allocation5], 4
      %s32 = int_to_ptr.vmem [resolvable:$true] %s31
      %37 = dma.hbm_to_vmem [thread:$0]  %s1, 256, %s32, [#allocation6], 128, 128, 8
    $region9: #{tpu_custom_call.1} parent=1 // pred_fallthru
      _
    // Predicated region
    $region10: #{tpu_custom_call.1} parent=1 // pred_check
      _
    $region11: #{tpu_custom_call.1} parent=1 // pred_check_branch
      %39 = sbr.rel (0) target = $region13
    $region12: #{tpu_custom_call.1} parent=1 // pred_region
      _
    $region13: #{tpu_custom_call.1} parent=1 // pred_fallthru
      _
    // Predicated region
    $region14: #{tpu_custom_call.1} parent=1 // pred_check
      _
    $region15: #{tpu_custom_call.1} parent=1 // pred_check_branch
      %41 = sbr.rel (0) target = $region17
    $region16: #{tpu_custom_call.1} parent=1 // pred_region
      %s43 = ssub.s32 2048, 2048
      %44 = vsyncadd [#allocation6], %s43
      %s45 = sshll.u32 [#allocation7], 4
      %s46 = int_to_ptr.vmem [resolvable:$true] %s45
      %51 = dma.hbm_to_vmem [thread:$0]  %s3, 2048, %s46, [#allocation6], 128, 128, 8
    $region17: #{tpu_custom_call.1} parent=1 // pred_fallthru
      _
    // Predicated region
    $region18: #{tpu_custom_call.1} parent=1 // pred_check
      _
    $region19: #{tpu_custom_call.1} parent=1 // pred_check_branch
      %53 = sbr.rel (0) target = $region21
    $region20: #{tpu_custom_call.1} parent=1 // pred_region
      _
    $region21: #{tpu_custom_call.1} parent=1 // pred_fallthru
      _
    // Predicated region
    $region22: #{tpu_custom_call.1} parent=1 // pred_check
      _
    $region23: #{tpu_custom_call.1} parent=1 // pred_check_branch
      %55 = sbr.rel (0) target = $region25
    $region24: #{tpu_custom_call.1} parent=1 // pred_region
      %s57 = ssub.s32 2048, 2048
      %58 = vsyncadd [#allocation9], %s57
      %s59 = sshll.u32 [#allocation8], 4
      %s60 = int_to_ptr.vmem [resolvable:$true] %s59
      %65 = dma.hbm_to_vmem [thread:$0]  %s5, 2048, %s60, [#allocation9], 128, 128, 8
    $region25: #{tpu_custom_call.1} parent=1 // pred_fallthru
      _
    // Predicated region
    $region26: #{tpu_custom_call.1} parent=1 // pred_check
      _
    $region27: #{tpu_custom_call.1} parent=1 // pred_check_branch
      %67 = sbr.rel (0) target = $region29
    $region28: #{tpu_custom_call.1} parent=1 // pred_region
      _
    $region29: #{tpu_custom_call.1} parent=1 // pred_fallthru
      _
    // Predicated region
    $region30: #{tpu_custom_call.1} parent=1 // pred_check
      _
    $region31: #{tpu_custom_call.1} parent=1 // pred_check_branch
      %69 = sbr.rel (0) target = $region33
    $region32: #{tpu_custom_call.1} parent=1 // pred_region
      %70 = dma.done [#allocation3], 128
    $region33: #{tpu_custom_call.1} parent=1 // pred_fallthru
      _
    // Predicated region
    $region34: #{tpu_custom_call.1} parent=1 // pred_check
      _
    $region35: #{tpu_custom_call.1} parent=1 // pred_check_branch
      %72 = sbr.rel (0) target = $region37
    $region36: #{tpu_custom_call.1} parent=1 // pred_region
      %73 = dma.done [#allocation6], 256
    $region37: #{tpu_custom_call.1} parent=1 // pred_fallthru
      _
    // Predicated region
    $region38: #{tpu_custom_call.1} parent=1 // pred_check
      _
    $region39: #{tpu_custom_call.1} parent=1 // pred_check_branch
      %75 = sbr.rel (0) target = $region41
    $region40: #{tpu_custom_call.1} parent=1 // pred_region
      %76 = dma.done [#allocation6], 2048
    $region41: #{tpu_custom_call.1} parent=1 // pred_fallthru
      _
    // Predicated region
    $region42: #{tpu_custom_call.1} parent=1 // pred_check
      _
    $region43: #{tpu_custom_call.1} parent=1 // pred_check_branch
      %78 = sbr.rel (0) target = $region45
    $region44: #{tpu_custom_call.1} parent=1 // pred_region
      %79 = dma.done [#allocation9], 2048
    $region45: #{tpu_custom_call.1} parent=1 // pred_fallthru
      _
    %v80 = vld [vmem:[#allocation2] sm:$0xff]
    %v81 = vld [vmem:[#allocation5] sm:$0xff]
    %v82 = vld [vmem:[#allocation5 + $0x8] sm:$0xff]
    %v83 = vld [vmem:[%s2] sm:$0x1]
    %v85 = vlaneseq
    %v86 = vshrl.u32 %v85, 7
    %v87 = vsub.s32 0, %v86
    %v88 = vrot.slane %v83, %v87
    %vm90 = vcmask 130048
    %v92 = vsel %vm90, %v80, 0
    %94 = vmatprep.subr.mxu0 0.0
    %95 = vmatpush1.msra.mxu0 0.0
    %96 = vmatprep.subr.mxu0 0.0
    %97 = vmatpush1.msra.mxu0 0.0
    %98 = vmatprep.subr.mxu0 0.0
    %99 = vmatpush1.msra.mxu0 0.0
    %100 = vmatprep.subr.mxu0 0.0
    %101 = vmatpush1.msra.mxu0 0.0
    %102 = vmatprep.subr.mxu0 0.0
    %103 = vmatpush1.msra.mxu0 0.0
    %104 = vmatprep.subr.mxu0 0.0
    %105 = vmatpush1.msra.mxu0 0.0
    %106 = vmatprep.subr.mxu0 0.0
    %107 = vmatpush1.msra.mxu0 0.0
    %108 = vmatprep.subr.mxu0 0.0
    %109 = vmatpush1.msra.mxu0 0.0
    %110 = vmatprep.subr.mxu0 0.0
    %111 = vmatpush1.msra.mxu0 0.0
    %112 = vmatprep.subr.mxu0 0.0
    %113 = vmatpush1.msra.mxu0 0.0
    %114 = vmatprep.subr.mxu0 0.0
    %115 = vmatpush1.msra.mxu0 0.0
    %116 = vmatprep.subr.mxu0 0.0
    %117 = vmatpush1.msra.mxu0 0.0
    %118 = vmatprep.subr.mxu0 0.0
    %119 = vmatpush1.msra.mxu0 0.0
    %120 = vmatprep.subr.mxu0 0.0
    %121 = vmatpush1.msra.mxu0 0.0
    %122 = vmatprep.subr.mxu0 0.0
    %123 = vmatpush1.msra.mxu0 %v82
    %124 = vmatprep.subr.mxu0 0.0
    %125 = vmatpush1.msra.mxu0 %v81
    %126 = vmatprep.subr.mxu0 0.0
    %127 = vmatpush2.msra.mxu0 0.0
    %128 = vmatprep.subr.mxu0 0.0
    %129 = vmatpush2.msra.mxu0 0.0
    %130 = vmatprep.subr.mxu0 0.0
    %131 = vmatpush2.msra.mxu0 0.0
    %132 = vmatprep.subr.mxu0 0.0
    %133 = vmatpush2.msra.mxu0 0.0
    %134 = vmatprep.subr.mxu0 0.0
    %135 = vmatpush2.msra.mxu0 0.0
    %136 = vmatprep.subr.mxu0 0.0
    %137 = vmatpush2.msra.mxu0 0.0
    %138 = vmatprep.subr.mxu0 0.0
    %139 = vmatpush2.msra.mxu0 0.0
    %140 = vmatprep.subr.mxu0 0.0
    %141 = vmatpush2.msra.mxu0 0.0
    %142 = vmatprep.subr.mxu0 0.0
    %143 = vmatpush2.msra.mxu0 0.0
    %144 = vmatprep.subr.mxu0 0.0
    %145 = vmatpush2.msra.mxu0 0.0
    %146 = vmatprep.subr.mxu0 0.0
    %147 = vmatpush2.msra.mxu0 0.0
    %148 = vmatprep.subr.mxu0 0.0
    %149 = vmatpush2.msra.mxu0 0.0
    %150 = vmatprep.subr.mxu0 0.0
    %151 = vmatpush2.msra.mxu0 0.0
    %152 = vmatprep.subr.mxu0 0.0
    %153 = vmatpush2.msra.mxu0 0.0
    %154 = vmatprep.subr.mxu0 0.0
    %155 = vmatpush2.msra.mxu0 0.0
    %156 = vmatprep.subr.mxu0 0.0
    %157 = vmatpush2.msra.mxu0 0.0
    %158 = vmatprep.mubr.f32.mxu0 0.0
    %159 = vmatmul.mubr.f32.gmra.mxu0 %v92
    %v160 = vpop.f32.mrf.mxu0
    %v161 = vadd.f32 %v88, %v160
    %v162 = vpop.f32.mrf.mxu0
    %163 = vdwg.mxu0
    %v164 = vtanh.pop %v161
    %v165 = vld [vmem:[#allocation7] sm:$0xff]
    %v166 = vld [vmem:[#allocation7 + $0x8] sm:$0xff]
    %v167 = vld [vmem:[#allocation7 + $0x10] sm:$0xff]
    %v168 = vld [vmem:[#allocation7 + $0x18] sm:$0xff]
    %v169 = vld [vmem:[#allocation7 + $0x20] sm:$0xff]
    %v170 = vld [vmem:[#allocation7 + $0x28] sm:$0xff]
    %v171 = vld [vmem:[#allocation7 + $0x30] sm:$0xff]
    %v172 = vld [vmem:[#allocation7 + $0x38] sm:$0xff]
    %v173 = vld [vmem:[#allocation7 + $0x40] sm:$0xff]
    %v174 = vld [vmem:[#allocation7 + $0x48] sm:$0xff]
    %v175 = vld [vmem:[#allocation7 + $0x50] sm:$0xff]
    %v176 = vld [vmem:[#allocation7 + $0x58] sm:$0xff]
    %v177 = vld [vmem:[#allocation7 + $0x60] sm:$0xff]
    %v178 = vld [vmem:[#allocation7 + $0x68] sm:$0xff]
    %v179 = vld [vmem:[#allocation7 + $0x70] sm:$0xff]
    %v180 = vld [vmem:[#allocation7 + $0x78] sm:$0xff]
    %v181 = vld [vmem:[%s4] sm:$0x1]
    %v183 = vlaneseq
    %v184 = vshrl.u32 %v183, 7
    %v185 = vsub.s32 0, %v184
    %v186 = vrot.slane %v181, %v185
    %188 = vmatprep.subr.mxu0 0.0
    %189 = vmatpush1.msra.mxu0 %v180
    %190 = vmatprep.subr.mxu0 0.0
    %191 = vmatpush1.msra.mxu0 %v179
    %192 = vmatprep.subr.mxu0 0.0
    %193 = vmatpush1.msra.mxu0 %v178
    %194 = vmatprep.subr.mxu0 0.0
    %195 = vmatpush1.msra.mxu0 %v177
    %196 = vmatprep.subr.mxu0 0.0
    %197 = vmatpush1.msra.mxu0 %v176
    %198 = vmatprep.subr.mxu0 0.0
    %199 = vmatpush1.msra.mxu0 %v175
    %200 = vmatprep.subr.mxu0 0.0
    %201 = vmatpush1.msra.mxu0 %v174
    %202 = vmatprep.subr.mxu0 0.0
    %203 = vmatpush1.msra.mxu0 %v173
    %204 = vmatprep.subr.mxu0 0.0
    %205 = vmatpush1.msra.mxu0 %v172
    %206 = vmatprep.subr.mxu0 0.0
    %207 = vmatpush1.msra.mxu0 %v171
    %208 = vmatprep.subr.mxu0 0.0
    %209 = vmatpush1.msra.mxu0 %v170
    %210 = vmatprep.subr.mxu0 0.0
    %211 = vmatpush1.msra.mxu0 %v169
    %212 = vmatprep.subr.mxu0 0.0
    %213 = vmatpush1.msra.mxu0 %v168
    %214 = vmatprep.subr.mxu0 0.0
    %215 = vmatpush1.msra.mxu0 %v167
    %216 = vmatprep.subr.mxu0 0.0
    %217 = vmatpush1.msra.mxu0 %v166
    %218 = vmatprep.subr.mxu0 0.0
    %219 = vmatpush1.msra.mxu0 %v165
    %220 = vmatprep.subr.mxu0 0.0
    %221 = vmatpush2.msra.mxu0 0.0
    %222 = vmatprep.subr.mxu0 0.0
    %223 = vmatpush2.msra.mxu0 0.0
    %224 = vmatprep.subr.mxu0 0.0
    %225 = vmatpush2.msra.mxu0 0.0
    %226 = vmatprep.subr.mxu0 0.0
    %227 = vmatpush2.msra.mxu0 0.0
    %228 = vmatprep.subr.mxu0 0.0
    %229 = vmatpush2.msra.mxu0 0.0
    %230 = vmatprep.subr.mxu0 0.0
    %231 = vmatpush2.msra.mxu0 0.0
    %232 = vmatprep.subr.mxu0 0.0
    %233 = vmatpush2.msra.mxu0 0.0
    %234 = vmatprep.subr.mxu0 0.0
    %235 = vmatpush2.msra.mxu0 0.0
    %236 = vmatprep.subr.mxu0 0.0
    %237 = vmatpush2.msra.mxu0 0.0
    %238 = vmatprep.subr.mxu0 0.0
    %239 = vmatpush2.msra.mxu0 0.0
    %240 = vmatprep.subr.mxu0 0.0
    %241 = vmatpush2.msra.mxu0 0.0
    %242 = vmatprep.subr.mxu0 0.0
    %243 = vmatpush2.msra.mxu0 0.0
    %244 = vmatprep.subr.mxu0 0.0
    %245 = vmatpush2.msra.mxu0 0.0
    %246 = vmatprep.subr.mxu0 0.0
    %247 = vmatpush2.msra.mxu0 0.0
    %248 = vmatprep.subr.mxu0 0.0
    %249 = vmatpush2.msra.mxu0 0.0
    %250 = vmatprep.subr.mxu0 0.0
    %251 = vmatpush2.msra.mxu0 0.0
    %252 = vmatprep.mubr.f32.mxu0 0.0
    %253 = vmatmul.mubr.f32.gmra.mxu0 %v164
    %v254 = vpop.f32.mrf.mxu0
    %v255 = vadd.f32 %v186, %v254
    %v256 = vpop.f32.mrf.mxu0
    %257 = vdwg.mxu0
    %v258 = vtanh.pop %v255
    %v259 = vld [vmem:[#allocation8] sm:$0xff]
    %v260 = vld [vmem:[#allocation8 + $0x8] sm:$0xff]
    %v261 = vld [vmem:[#allocation8 + $0x10] sm:$0xff]
    %v262 = vld [vmem:[#allocation8 + $0x18] sm:$0xff]
    %v263 = vld [vmem:[#allocation8 + $0x20] sm:$0xff]
    %v264 = vld [vmem:[#allocation8 + $0x28] sm:$0xff]
    %v265 = vld [vmem:[#allocation8 + $0x30] sm:$0xff]
    %v266 = vld [vmem:[#allocation8 + $0x38] sm:$0xff]
    %v267 = vld [vmem:[#allocation8 + $0x40] sm:$0xff]
    %v268 = vld [vmem:[#allocation8 + $0x48] sm:$0xff]
    %v269 = vld [vmem:[#allocation8 + $0x50] sm:$0xff]
    %v270 = vld [vmem:[#allocation8 + $0x58] sm:$0xff]
    %v271 = vld [vmem:[#allocation8 + $0x60] sm:$0xff]
    %v272 = vld [vmem:[#allocation8 + $0x68] sm:$0xff]
    %v273 = vld [vmem:[#allocation8 + $0x70] sm:$0xff]
    %v274 = vld [vmem:[#allocation8 + $0x78] sm:$0xff]
    %v275 = vld [vmem:[%s6] sm:$0x1]
    %v277 = vlaneseq
    %v278 = vshrl.u32 %v277, 7
    %v279 = vsub.s32 0, %v278
    %v280 = vrot.slane %v275, %v279
    %282 = vmatprep.subr.mxu0 0.0
    %283 = vmatpush1.msra.mxu0 %v274
    %284 = vmatprep.subr.mxu0 0.0
    %285 = vmatpush1.msra.mxu0 %v273
    %286 = vmatprep.subr.mxu0 0.0
    %287 = vmatpush1.msra.mxu0 %v272
    %288 = vmatprep.subr.mxu0 0.0
    %289 = vmatpush1.msra.mxu0 %v271
    %290 = vmatprep.subr.mxu0 0.0
    %291 = vmatpush1.msra.mxu0 %v270
    %292 = vmatprep.subr.mxu0 0.0
    %293 = vmatpush1.msra.mxu0 %v269
    %294 = vmatprep.subr.mxu0 0.0
    %295 = vmatpush1.msra.mxu0 %v268
    %296 = vmatprep.subr.mxu0 0.0
    %297 = vmatpush1.msra.mxu0 %v267
    %298 = vmatprep.subr.mxu0 0.0
    %299 = vmatpush1.msra.mxu0 %v266
    %300 = vmatprep.subr.mxu0 0.0
    %301 = vmatpush1.msra.mxu0 %v265
    %302 = vmatprep.subr.mxu0 0.0
    %303 = vmatpush1.msra.mxu0 %v264
    %304 = vmatprep.subr.mxu0 0.0
    %305 = vmatpush1.msra.mxu0 %v263
    %306 = vmatprep.subr.mxu0 0.0
    %307 = vmatpush1.msra.mxu0 %v262
    %308 = vmatprep.subr.mxu0 0.0
    %309 = vmatpush1.msra.mxu0 %v261
    %310 = vmatprep.subr.mxu0 0.0
    %311 = vmatpush1.msra.mxu0 %v260
    %312 = vmatprep.subr.mxu0 0.0
    %313 = vmatpush1.msra.mxu0 %v259
    %314 = vmatprep.subr.mxu0 0.0
    %315 = vmatpush2.msra.mxu0 0.0
    %316 = vmatprep.subr.mxu0 0.0
    %317 = vmatpush2.msra.mxu0 0.0
    %318 = vmatprep.subr.mxu0 0.0
    %319 = vmatpush2.msra.mxu0 0.0
    %320 = vmatprep.subr.mxu0 0.0
    %321 = vmatpush2.msra.mxu0 0.0
    %322 = vmatprep.subr.mxu0 0.0
    %323 = vmatpush2.msra.mxu0 0.0
    %324 = vmatprep.subr.mxu0 0.0
    %325 = vmatpush2.msra.mxu0 0.0
    %326 = vmatprep.subr.mxu0 0.0
    %327 = vmatpush2.msra.mxu0 0.0
    %328 = vmatprep.subr.mxu0 0.0
    %329 = vmatpush2.msra.mxu0 0.0
    %330 = vmatprep.subr.mxu0 0.0
    %331 = vmatpush2.msra.mxu0 0.0
    %332 = vmatprep.subr.mxu0 0.0
    %333 = vmatpush2.msra.mxu0 0.0
    %334 = vmatprep.subr.mxu0 0.0
    %335 = vmatpush2.msra.mxu0 0.0
    %336 = vmatprep.subr.mxu0 0.0
    %337 = vmatpush2.msra.mxu0 0.0
    %338 = vmatprep.subr.mxu0 0.0
    %339 = vmatpush2.msra.mxu0 0.0
    %340 = vmatprep.subr.mxu0 0.0
    %341 = vmatpush2.msra.mxu0 0.0
    %342 = vmatprep.subr.mxu0 0.0
    %343 = vmatpush2.msra.mxu0 0.0
    %344 = vmatprep.subr.mxu0 0.0
    %345 = vmatpush2.msra.mxu0 0.0
    %346 = vmatprep.mubr.f32.mxu0 0.0
    %347 = vmatmul.mubr.f32.gmra.mxu0 %v258
    %v348 = vpop.f32.mrf.mxu0
    %v349 = vadd.f32 %v280, %v348
    %v350 = vpop.f32.mrf.mxu0
    %351 = vdwg.mxu0
    %352 = vst [vmem:[#allocation10] sm:$0xff] %v349
    // Predicated region
    $region46: #{tpu_custom_call.1} parent=1 // pred_check
      _
    $region47: #{tpu_custom_call.1} parent=1 // pred_check_branch
      %354 = sbr.rel (0) target = $region49
    $region48: #{tpu_custom_call.1} parent=1 // pred_region
      %s356 = ssub.s32 128, 128
      %357 = vsyncadd [#allocation4], %s356
      %s359 = sshll.u32 [#allocation10], 4
      %s360 = int_to_ptr.vmem [resolvable:$true] %s359
      %362 = dma.vmem_to_hbm [thread:$0]  %s360, 128, %s7, [#allocation4]
    $region49: #{tpu_custom_call.1} parent=1 // pred_fallthru
      _
    // Predicated region
    $region50: #{tpu_custom_call.1} parent=1 // pred_check
      _
    $region51: #{tpu_custom_call.1} parent=1 // pred_check_branch
      %364 = sbr.rel (0) target = $region53
    $region52: #{tpu_custom_call.1} parent=1 // pred_region
      %365 = dma.done [#allocation4], 128
    $region53: #{tpu_custom_call.1} parent=1 // pred_fallthru
      _
    %366 = vsyncpa [#allocation3], 1
    %367 = vsyncpa [#allocation6], 1
    %368 = vsyncpa [#allocation9], 1
    %369 = vsyncpa [#allocation4], 1

// kernel: tpu_custom_call.1
$region0: #{tpu_custom_call.1}
  #allocation0 [shape = 'u32[]', space=smem, size = 0x4, offset = 0x4, fixed_abs, tag = 'smem constant byte address 0x4 - core index']
  #allocation1 [shape = 'u32[144,128]{1,0:T(1,128)}', space=vmem, size = 0x12000, scoped, tag = 'internal scratch']
  %s0 = inlined_call_operand.hbm [shape: f32[8,16], index: 0, kind: input, shape index: {}]
  %s1 = inlined_call_operand.hbm [shape: f32[16,128], index: 1, kind: input, shape index: {}]
  %s2 = inlined_call_operand.vmem [shape: f32[1,128], index: 2, kind: input, shape index: {}]
  %s3 = inlined_call_operand.hbm [shape: f32[128,128], index: 3, kind: input, shape index: {}]
  %s4 = inlined_call_operand.vmem [shape: f32[1,128], index: 4, kind: input, shape index: {}]
  %s5 = inlined_call_operand.hbm [shape: f32[128,128], index: 5, kind: input, shape index: {}]
  %s6 = inlined_call_operand.vmem [shape: f32[1,128], index: 6, kind: input, shape index: {}]
  %s7 = inlined_call_operand.hbm [shape: f32[8,128], index: 7, kind: output, shape index: {}]
  %s8 = sld [smem:[#allocation0]]
  $region54: #{tpu_custom_call.1} parent=0
    _
  %s10 = ssub.s32 1, %s8
  %s11 = scalar_select 0, %s10, %s8
  $region1: #{tpu_custom_call.1} parent=0
    #allocation2 [shape = 'u8[4096]{0}', space=vmem, size = 0x1000, scoped, tag = 'input window, operand 0, single buffered']
    #allocation3 [shape = 's32[1]{0}', space=sflag, size = 0x4, scoped, tag = 'scoped memory for tpu_custom_call.1']
    #allocation4 [shape = 's32[1]{0}', space=sflag, size = 0x4, scoped, tag = 'scoped memory for tpu_custom_call.1']
    #allocation5 [shape = 'u8[8192]{0}', space=vmem, size = 0x2000, scoped, tag = 'input window, operand 1, single buffered']
    #allocation6 [shape = 's32[1]{0}', space=sflag, size = 0x4, scoped, tag = 'scoped memory for tpu_custom_call.1']
    #allocation7 [shape = 'u8[65536]{0}', space=vmem, size = 0x10000, scoped, tag = 'input window, operand 3, single buffered']
    #allocation8 [shape = 'u8[65536]{0}', space=vmem, size = 0x10000, scoped, tag = 'input window, operand 5, single buffered']
    #allocation9 [shape = 's32[1]{0}', space=sflag, size = 0x4, scoped, tag = 'scoped memory for tpu_custom_call.1']
    #allocation10 [shape = 'u8[4096]{0}', space=vmem, size = 0x1000, scoped, tag = 'output window, operand 0, single buffered']
    %12 = vsyncpa [#allocation3], 0
    %13 = vsyncpa [#allocation6], 0
    %14 = vsyncpa [#allocation9], 0
    %15 = vsyncpa [#allocation4], 0
    // Predicated region
    $region2: #{tpu_custom_call.1} parent=1 // pred_check
      _
    $region3: #{tpu_custom_call.1} parent=1 // pred_check_branch
      %17 = sbr.rel (0) target = $region5
    $region4: #{tpu_custom_call.1} parent=1 // pred_region
      %s19 = ssub.s32 128, 128
      %20 = vsyncadd [#allocation3], %s19
      %s22 = sshll.u32 [#allocation2], 4
      %s23 = int_to_ptr.vmem [resolvable:$true] %s22
      %25 = dma.hbm_to_vmem [thread:$0]  %s0, 128, %s23, [#allocation3]
    $region5: #{tpu_custom_call.1} parent=1 // pred_fallthru
      _
    // Predicated region
    $region6: #{tpu_custom_call.1} parent=1 // pred_check
      _
    $region7: #{tpu_custom_call.1} parent=1 // pred_check_branch
      %27 = sbr.rel (0) target = $region9
    $region8: #{tpu_custom_call.1} parent=1 // pred_region
      %s29 = ssub.s32 256, 256
      %30 = vsyncadd [#allocation6], %s29
      %s31 = sshll.u32 [#allocation5], 4
      %s32 = int_to_ptr.vmem [resolvable:$true] %s31
      %37 = dma.hbm_to_vmem [thread:$0]  %s1, 256, %s32, [#allocation6], 128, 128, 8
    $region9: #{tpu_custom_call.1} parent=1 // pred_fallthru
      _
    // Predicated region
    $region10: #{tpu_custom_call.1} parent=1 // pred_check
      _
    $region11: #{tpu_custom_call.1} parent=1 // pred_check_branch
      %39 = sbr.rel (0) target = $region13
    $region12: #{tpu_custom_call.1} parent=1 // pred_region
      _
    $region13: #{tpu_custom_call.1} parent=1 // pred_fallthru
      _
    // Predicated region
    $region14: #{tpu_custom_call.1} parent=1 // pred_check
      _
    $region15: #{tpu_custom_call.1} parent=1 // pred_check_branch
      %41 = sbr.rel (0) target = $region17
    $region16: #{tpu_custom_call.1} parent=1 // pred_region
      %s43 = ssub.s32 2048, 2048
      %44 = vsyncadd [#allocation6], %s43
      %s45 = sshll.u32 [#allocation7], 4
      %s46 = int_to_ptr.vmem [resolvable:$true] %s45
      %51 = dma.hbm_to_vmem [thread:$0]  %s3, 2048, %s46, [#allocation6], 128, 128, 8
    $region17: #{tpu_custom_call.1} parent=1 // pred_fallthru
      _
    // Predicated region
    $region18: #{tpu_custom_call.1} parent=1 // pred_check
      _
    $region19: #{tpu_custom_call.1} parent=1 // pred_check_branch
      %53 = sbr.rel (0) target = $region21
    $region20: #{tpu_custom_call.1} parent=1 // pred_region
      _
    $region21: #{tpu_custom_call.1} parent=1 // pred_fallthru
      _
    // Predicated region
    $region22: #{tpu_custom_call.1} parent=1 // pred_check
      _
    $region23: #{tpu_custom_call.1} parent=1 // pred_check_branch
      %55 = sbr.rel (0) target = $region25
    $region24: #{tpu_custom_call.1} parent=1 // pred_region
      %s57 = ssub.s32 2048, 2048
      %58 = vsyncadd [#allocation9], %s57
      %s59 = sshll.u32 [#allocation8], 4
      %s60 = int_to_ptr.vmem [resolvable:$true] %s59
      %65 = dma.hbm_to_vmem [thread:$0]  %s5, 2048, %s60, [#allocation9], 128, 128, 8
    $region25: #{tpu_custom_call.1} parent=1 // pred_fallthru
      _
    // Predicated region
    $region26: #{tpu_custom_call.1} parent=1 // pred_check
      _
    $region27: #{tpu_custom_call.1} parent=1 // pred_check_branch
      %67 = sbr.rel (0) target = $region29
    $region28: #{tpu_custom_call.1} parent=1 // pred_region
      _
    $region29: #{tpu_custom_call.1} parent=1 // pred_fallthru
      _
    // Predicated region
    $region30: #{tpu_custom_call.1} parent=1 // pred_check
      _
    $region31: #{tpu_custom_call.1} parent=1 // pred_check_branch
      %69 = sbr.rel (0) target = $region33
    $region32: #{tpu_custom_call.1} parent=1 // pred_region
      %70 = dma.done [#allocation3], 128
    $region33: #{tpu_custom_call.1} parent=1 // pred_fallthru
      _
    // Predicated region
    $region34: #{tpu_custom_call.1} parent=1 // pred_check
      _
    $region35: #{tpu_custom_call.1} parent=1 // pred_check_branch
      %72 = sbr.rel (0) target = $region37
    $region36: #{tpu_custom_call.1} parent=1 // pred_region
      %73 = dma.done [#allocation6], 256
    $region37: #{tpu_custom_call.1} parent=1 // pred_fallthru
      _
    // Predicated region
    $region38: #{tpu_custom_call.1} parent=1 // pred_check
      _
    $region39: #{tpu_custom_call.1} parent=1 // pred_check_branch
      %75 = sbr.rel (0) target = $region41
    $region40: #{tpu_custom_call.1} parent=1 // pred_region
      %76 = dma.done [#allocation6], 2048
    $region41: #{tpu_custom_call.1} parent=1 // pred_fallthru
      _
    // Predicated region
    $region42: #{tpu_custom_call.1} parent=1 // pred_check
      _
    $region43: #{tpu_custom_call.1} parent=1 // pred_check_branch
      %78 = sbr.rel (0) target = $region45
    $region44: #{tpu_custom_call.1} parent=1 // pred_region
      %79 = dma.done [#allocation9], 2048
    $region45: #{tpu_custom_call.1} parent=1 // pred_fallthru
      _
    %v80 = vld [vmem:[#allocation2] sm:$0xff]
    %v81 = vld [vmem:[#allocation5] sm:$0xff]
    %v82 = vld [vmem:[#allocation5 + $0x8] sm:$0xff]
    %v83 = vld [vmem:[%s2] sm:$0x1]
    %v85 = vlaneseq
    %v86 = vshrl.u32 %v85, 7
    %v87 = vsub.s32 0, %v86
    %v88 = vrot.slane %v83, %v87
    %vm90 = vcmask 130048
    %v92 = vsel %vm90, %v80, 0
    %94 = vmatprep.subr.mxu0 0.0
    %95 = vmatpush1.msra.mxu0 0.0
    %96 = vmatprep.subr.mxu0 0.0
    %97 = vmatpush1.msra.mxu0 0.0
    %98 = vmatprep.subr.mxu0 0.0
    %99 = vmatpush1.msra.mxu0 0.0
    %100 = vmatprep.subr.mxu0 0.0
    %101 = vmatpush1.msra.mxu0 0.0
    %102 = vmatprep.subr.mxu0 0.0
    %103 = vmatpush1.msra.mxu0 0.0
    %104 = vmatprep.subr.mxu0 0.0
    %105 = vmatpush1.msra.mxu0 0.0
    %106 = vmatprep.subr.mxu0 0.0
    %107 = vmatpush1.msra.mxu0 0.0
    %108 = vmatprep.subr.mxu0 0.0
    %109 = vmatpush1.msra.mxu0 0.0
    %110 = vmatprep.subr.mxu0 0.0
    %111 = vmatpush1.msra.mxu0 0.0
    %112 = vmatprep.subr.mxu0 0.0
    %113 = vmatpush1.msra.mxu0 0.0
    %114 = vmatprep.subr.mxu0 0.0
    %115 = vmatpush1.msra.mxu0 0.0
    %116 = vmatprep.subr.mxu0 0.0
    %117 = vmatpush1.msra.mxu0 0.0
    %118 = vmatprep.subr.mxu0 0.0
    %119 = vmatpush1.msra.mxu0 0.0
    %120 = vmatprep.subr.mxu0 0.0
    %121 = vmatpush1.msra.mxu0 0.0
    %122 = vmatprep.subr.mxu0 0.0
    %123 = vmatpush1.msra.mxu0 %v82
    %124 = vmatprep.subr.mxu0 0.0
    %125 = vmatpush1.msra.mxu0 %v81
    %126 = vmatprep.subr.mxu0 0.0
    %127 = vmatpush2.msra.mxu0 0.0
    %128 = vmatprep.subr.mxu0 0.0
    %129 = vmatpush2.msra.mxu0 0.0
    %130 = vmatprep.subr.mxu0 0.0
    %131 = vmatpush2.msra.mxu0 0.0
    %132 = vmatprep.subr.mxu0 0.0
    %133 = vmatpush2.msra.mxu0 0.0
    %134 = vmatprep.subr.mxu0 0.0
    %135 = vmatpush2.msra.mxu0 0.0
    %136 = vmatprep.subr.mxu0 0.0
    %137 = vmatpush2.msra.mxu0 0.0
    %138 = vmatprep.subr.mxu0 0.0
    %139 = vmatpush2.msra.mxu0 0.0
    %140 = vmatprep.subr.mxu0 0.0
    %141 = vmatpush2.msra.mxu0 0.0
    %142 = vmatprep.subr.mxu0 0.0
    %143 = vmatpush2.msra.mxu0 0.0
    %144 = vmatprep.subr.mxu0 0.0
    %145 = vmatpush2.msra.mxu0 0.0
    %146 = vmatprep.subr.mxu0 0.0
    %147 = vmatpush2.msra.mxu0 0.0
    %148 = vmatprep.subr.mxu0 0.0
    %149 = vmatpush2.msra.mxu0 0.0
    %150 = vmatprep.subr.mxu0 0.0
    %151 = vmatpush2.msra.mxu0 0.0
    %152 = vmatprep.subr.mxu0 0.0
    %153 = vmatpush2.msra.mxu0 0.0
    %154 = vmatprep.subr.mxu0 0.0
    %155 = vmatpush2.msra.mxu0 0.0
    %156 = vmatprep.subr.mxu0 0.0
    %157 = vmatpush2.msra.mxu0 0.0
    %158 = vmatprep.mubr.f32.mxu0 0.0
    %159 = vmatmul.mubr.f32.gmra.mxu0 %v92
    %v160 = vpop.f32.mrf.mxu0
    %v161 = vadd.f32 %v88, %v160
    %v162 = vpop.f32.mrf.mxu0
    %163 = vdwg.mxu0
    %v164 = vtanh.pop %v161
    %v165 = vld [vmem:[#allocation7] sm:$0xff]
    %v166 = vld [vmem:[#allocation7 + $0x8] sm:$0xff]
    %v167 = vld [vmem:[#allocation7 + $0x10] sm:$0xff]
    %v168 = vld [vmem:[#allocation7 + $0x18] sm:$0xff]
    %v169 = vld [vmem:[#allocation7 + $0x20] sm:$0xff]
    %v170 = vld [vmem:[#allocation7 + $0x28] sm:$0xff]
    %v171 = vld [vmem:[#allocation7 + $0x30] sm:$0xff]
    %v172 = vld [vmem:[#allocation7 + $0x38] sm:$0xff]
    %v173 = vld [vmem:[#allocation7 + $0x40] sm:$0xff]
    %v174 = vld [vmem:[#allocation7 + $0x48] sm:$0xff]
    %v175 = vld [vmem:[#allocation7 + $0x50] sm:$0xff]
    %v176 = vld [vmem:[#allocation7 + $0x58] sm:$0xff]
    %v177 = vld [vmem:[#allocation7 + $0x60] sm:$0xff]
    %v178 = vld [vmem:[#allocation7 + $0x68] sm:$0xff]
    %v179 = vld [vmem:[#allocation7 + $0x70] sm:$0xff]
    %v180 = vld [vmem:[#allocation7 + $0x78] sm:$0xff]
    %v181 = vld [vmem:[%s4] sm:$0x1]
    %v183 = vlaneseq
    %v184 = vshrl.u32 %v183, 7
    %v185 = vsub.s32 0, %v184
    %v186 = vrot.slane %v181, %v185
    %188 = vmatprep.subr.mxu0 0.0
    %189 = vmatpush1.msra.mxu0 %v180
    %190 = vmatprep.subr.mxu0 0.0
    %191 = vmatpush1.msra.mxu0 %v179
    %192 = vmatprep.subr.mxu0 0.0
    %193 = vmatpush1.msra.mxu0 %v178
    %194 = vmatprep.subr.mxu0 0.0
    %195 = vmatpush1.msra.mxu0 %v177
    %196 = vmatprep.subr.mxu0 0.0
    %197 = vmatpush1.msra.mxu0 %v176
    %198 = vmatprep.subr.mxu0 0.0
    %199 = vmatpush1.msra.mxu0 %v175
    %200 = vmatprep.subr.mxu0 0.0
    %201 = vmatpush1.msra.mxu0 %v174
    %202 = vmatprep.subr.mxu0 0.0
    %203 = vmatpush1.msra.mxu0 %v173
    %204 = vmatprep.subr.mxu0 0.0
    %205 = vmatpush1.msra.mxu0 %v172
    %206 = vmatprep.subr.mxu0 0.0
    %207 = vmatpush1.msra.mxu0 %v171
    %208 = vmatprep.subr.mxu0 0.0
    %209 = vmatpush1.msra.mxu0 %v170
    %210 = vmatprep.subr.mxu0 0.0
    %211 = vmatpush1.msra.mxu0 %v169
    %212 = vmatprep.subr.mxu0 0.0
    %213 = vmatpush1.msra.mxu0 %v168
    %214 = vmatprep.subr.mxu0 0.0
    %215 = vmatpush1.msra.mxu0 %v167
    %216 = vmatprep.subr.mxu0 0.0
    %217 = vmatpush1.msra.mxu0 %v166
    %218 = vmatprep.subr.mxu0 0.0
    %219 = vmatpush1.msra.mxu0 %v165
    %220 = vmatprep.subr.mxu0 0.0
    %221 = vmatpush2.msra.mxu0 0.0
    %222 = vmatprep.subr.mxu0 0.0
    %223 = vmatpush2.msra.mxu0 0.0
    %224 = vmatprep.subr.mxu0 0.0
    %225 = vmatpush2.msra.mxu0 0.0
    %226 = vmatprep.subr.mxu0 0.0
    %227 = vmatpush2.msra.mxu0 0.0
    %228 = vmatprep.subr.mxu0 0.0
    %229 = vmatpush2.msra.mxu0 0.0
    %230 = vmatprep.subr.mxu0 0.0
    %231 = vmatpush2.msra.mxu0 0.0
    %232 = vmatprep.subr.mxu0 0.0
    %233 = vmatpush2.msra.mxu0 0.0
    %234 = vmatprep.subr.mxu0 0.0
    %235 = vmatpush2.msra.mxu0 0.0
    %236 = vmatprep.subr.mxu0 0.0
    %237 = vmatpush2.msra.mxu0 0.0
    %238 = vmatprep.subr.mxu0 0.0
    %239 = vmatpush2.msra.mxu0 0.0
    %240 = vmatprep.subr.mxu0 0.0
    %241 = vmatpush2.msra.mxu0 0.0
    %242 = vmatprep.subr.mxu0 0.0
    %243 = vmatpush2.msra.mxu0 0.0
    %244 = vmatprep.subr.mxu0 0.0
    %245 = vmatpush2.msra.mxu0 0.0
    %246 = vmatprep.subr.mxu0 0.0
    %247 = vmatpush2.msra.mxu0 0.0
    %248 = vmatprep.subr.mxu0 0.0
    %249 = vmatpush2.msra.mxu0 0.0
    %250 = vmatprep.subr.mxu0 0.0
    %251 = vmatpush2.msra.mxu0 0.0
    %252 = vmatprep.mubr.f32.mxu0 0.0
    %253 = vmatmul.mubr.f32.gmra.mxu0 %v164
    %v254 = vpop.f32.mrf.mxu0
    %v255 = vadd.f32 %v186, %v254
    %v256 = vpop.f32.mrf.mxu0
    %257 = vdwg.mxu0
    %v258 = vtanh.pop %v255
    %v259 = vld [vmem:[#allocation8] sm:$0xff]
    %v260 = vld [vmem:[#allocation8 + $0x8] sm:$0xff]
    %v261 = vld [vmem:[#allocation8 + $0x10] sm:$0xff]
    %v262 = vld [vmem:[#allocation8 + $0x18] sm:$0xff]
    %v263 = vld [vmem:[#allocation8 + $0x20] sm:$0xff]
    %v264 = vld [vmem:[#allocation8 + $0x28] sm:$0xff]
    %v265 = vld [vmem:[#allocation8 + $0x30] sm:$0xff]
    %v266 = vld [vmem:[#allocation8 + $0x38] sm:$0xff]
    %v267 = vld [vmem:[#allocation8 + $0x40] sm:$0xff]
    %v268 = vld [vmem:[#allocation8 + $0x48] sm:$0xff]
    %v269 = vld [vmem:[#allocation8 + $0x50] sm:$0xff]
    %v270 = vld [vmem:[#allocation8 + $0x58] sm:$0xff]
    %v271 = vld [vmem:[#allocation8 + $0x60] sm:$0xff]
    %v272 = vld [vmem:[#allocation8 + $0x68] sm:$0xff]
    %v273 = vld [vmem:[#allocation8 + $0x70] sm:$0xff]
    %v274 = vld [vmem:[#allocation8 + $0x78] sm:$0xff]
    %v275 = vld [vmem:[%s6] sm:$0x1]
    %v277 = vlaneseq
    %v278 = vshrl.u32 %v277, 7
    %v279 = vsub.s32 0, %v278
    %v280 = vrot.slane %v275, %v279
    %282 = vmatprep.subr.mxu0 0.0
    %283 = vmatpush1.msra.mxu0 %v274
    %284 = vmatprep.subr.mxu0 0.0
    %285 = vmatpush1.msra.mxu0 %v273
    %286 = vmatprep.subr.mxu0 0.0
    %287 = vmatpush1.msra.mxu0 %v272
    %288 = vmatprep.subr.mxu0 0.0
    %289 = vmatpush1.msra.mxu0 %v271
    %290 = vmatprep.subr.mxu0 0.0
    %291 = vmatpush1.msra.mxu0 %v270
    %292 = vmatprep.subr.mxu0 0.0
    %293 = vmatpush1.msra.mxu0 %v269
    %294 = vmatprep.subr.mxu0 0.0
    %295 = vmatpush1.msra.mxu0 %v268
    %296 = vmatprep.subr.mxu0 0.0
    %297 = vmatpush1.msra.mxu0 %v267
    %298 = vmatprep.subr.mxu0 0.0
    %299 = vmatpush1.msra.mxu0 %v266
    %300 = vmatprep.subr.mxu0 0.0
    %301 = vmatpush1.msra.mxu0 %v265
    %302 = vmatprep.subr.mxu0 0.0
    %303 = vmatpush1.msra.mxu0 %v264
    %304 = vmatprep.subr.mxu0 0.0
    %305 = vmatpush1.msra.mxu0 %v263
    %306 = vmatprep.subr.mxu0 0.0
    %307 = vmatpush1.msra.mxu0 %v262
    %308 = vmatprep.subr.mxu0 0.0
    %309 = vmatpush1.msra.mxu0 %v261
    %310 = vmatprep.subr.mxu0 0.0
    %311 = vmatpush1.msra.mxu0 %v260
    %312 = vmatprep.subr.mxu0 0.0
    %313 = vmatpush1.msra.mxu0 %v259
    %314 = vmatprep.subr.mxu0 0.0
    %315 = vmatpush2.msra.mxu0 0.0
    %316 = vmatprep.subr.mxu0 0.0
    %317 = vmatpush2.msra.mxu0 0.0
    %318 = vmatprep.subr.mxu0 0.0
    %319 = vmatpush2.msra.mxu0 0.0
    %320 = vmatprep.subr.mxu0 0.0
    %321 = vmatpush2.msra.mxu0 0.0
    %322 = vmatprep.subr.mxu0 0.0
    %323 = vmatpush2.msra.mxu0 0.0
    %324 = vmatprep.subr.mxu0 0.0
    %325 = vmatpush2.msra.mxu0 0.0
    %326 = vmatprep.subr.mxu0 0.0
    %327 = vmatpush2.msra.mxu0 0.0
    %328 = vmatprep.subr.mxu0 0.0
    %329 = vmatpush2.msra.mxu0 0.0
    %330 = vmatprep.subr.mxu0 0.0
    %331 = vmatpush2.msra.mxu0 0.0
    %332 = vmatprep.subr.mxu0 0.0
    %333 = vmatpush2.msra.mxu0 0.0
    %334 = vmatprep.subr.mxu0 0.0
    %335 = vmatpush2.msra.mxu0 0.0
    %336 = vmatprep.subr.mxu0 0.0
    %337 = vmatpush2.msra.mxu0 0.0
    %338 = vmatprep.subr.mxu0 0.0
    %339 = vmatpush2.msra.mxu0 0.0
    %340 = vmatprep.subr.mxu0 0.0
    %341 = vmatpush2.msra.mxu0 0.0
    %342 = vmatprep.subr.mxu0 0.0
    %343 = vmatpush2.msra.mxu0 0.0
    %344 = vmatprep.subr.mxu0 0.0
    %345 = vmatpush2.msra.mxu0 0.0
    %346 = vmatprep.mubr.f32.mxu0 0.0
    %347 = vmatmul.mubr.f32.gmra.mxu0 %v258
    %v348 = vpop.f32.mrf.mxu0
    %v349 = vadd.f32 %v280, %v348
    %v350 = vpop.f32.mrf.mxu0
    %351 = vdwg.mxu0
    %352 = vst [vmem:[#allocation10] sm:$0xff] %v349
    // Predicated region
    $region46: #{tpu_custom_call.1} parent=1 // pred_check
      _
    $region47: #{tpu_custom_call.1} parent=1 // pred_check_branch
      %354 = sbr.rel (0) target = $region49
    $region48: #{tpu_custom_call.1} parent=1 // pred_region
      %s356 = ssub.s32 128, 128
      %357 = vsyncadd [#allocation4], %s356
      %s359 = sshll.u32 [#allocation10], 4
      %s360 = int_to_ptr.vmem [resolvable:$true] %s359
      %362 = dma.vmem_to_hbm [thread:$0]  %s360, 128, %s7, [#allocation4]
    $region49: #{tpu_custom_call.1} parent=1 // pred_fallthru
      _
    // Predicated region
    $region50: #{tpu_custom_call.1} parent=1 // pred_check
      _
    $region51: #{tpu_custom_call.1} parent=1 // pred_check_branch
      %364 = sbr.rel (0) target = $region53
    $region52: #{tpu_custom_call.1} parent=1 // pred_region
      %365 = dma.done [#allocation4], 128
    $region53: #{tpu_custom_call.1} parent=1 // pred_fallthru
      _
    %366 = vsyncpa [#allocation3], 1
    %367 = vsyncpa [#allocation6], 1
    %368 = vsyncpa [#allocation9], 1
    %369 = vsyncpa [#allocation4], 1

</llo_original>
